<compile_context>
chip_gen: v5e
topology: v5e:2x2
jax: 0.10.0
libtpu: 0.0.40
codegen_flags: <defaults>
</compile_context>

<pallas_src>
import functools

import jax
import jax.numpy as jnp
from jax.experimental import pallas as pl
from jax.experimental.pallas import tpu as pltpu


def _sigma_branch_kernel(x_ref, w1_ref, w2_ref, b2_ref, o_ref, acc_ref, *, inv_hw):
    # x_ref : (1, C, T_HW)   native dtype (f32/bf16)
    # w1_ref: (C, hidden)    f32  (fc1 weight, transposed, no bias)
    # w2_ref: (hidden, 3C)   f32  (fc2 weight, transposed)
    # b2_ref: (1, 3C)        f32  (fc2 bias)
    # o_ref : (1, 1, 3C)     output block (resident across the reduction axis)
    # acc_ref: (1, C, T_HW)  f32 VMEM scratch accumulator
    k = pl.program_id(1)

    @pl.when(k == 0)
    def _init():
        acc_ref[...] = jnp.zeros_like(acc_ref)

    # Steady state: pure VPU elementwise accumulate of the streamed tile.
    acc_ref[...] += x_ref[...].astype(jnp.float32)

    @pl.when(k == pl.num_programs(1) - 1)
    def _finalize():
        # One cross-lane reduce (XLU) per batch row, then the tiny FC stack.
        pooled = jnp.sum(acc_ref[...], axis=-1) * inv_hw                        # (1, C)
        h = jnp.dot(pooled, w1_ref[...], preferred_element_type=jnp.float32)    # (1, hidden)
        h = jnp.maximum(h, 0.0)
        y = jnp.dot(h, w2_ref[...], preferred_element_type=jnp.float32)         # (1, 3C)
        y = y + b2_ref[...]
        o_ref[...] = jax.nn.sigmoid(y)[:, None, :].astype(o_ref.dtype)


def _pick_hw_tile(hw, c, itemsize, cap, budget_bytes):
    """Largest multiple-of-128 divisor of hw (<= cap) whose per-step working set
    (double-buffered x tile + f32 accumulator) fits the VMEM budget."""
    def fits(t):
        return (2 * c * t * itemsize + 4 * c * t) <= budget_bytes

    start = min(cap, (hw // 128) * 128)
    for t in range(start, 0, -128):
        if hw % t == 0 and fits(t):
            return t
    # Small spatial extent (or no 128-multiple divisor): single full tile.
    # TODO(synk): masked handling for huge HW with no 128-multiple divisor.
    return hw


def sigma_branch(x, w1, w2, b2, *, hw_tile_cap=2048, vmem_budget_bytes=24 << 20):
    """x: (B, C, H, W) NCHW -> (B, C, 3), matching sigmaBranch.forward."""
    B, C, H, W = x.shape
    HW = H * W
    hidden = w1.shape[1]
    out_planes = 3 * C

    x_flat = x.reshape(B, C, HW)  # keep native dtype; upcast per tile in-kernel
    T = _pick_hw_tile(HW, C, x_flat.dtype.itemsize, hw_tile_cap, vmem_budget_bytes)
    assert HW % T == 0
    n_k = HW // T

    # VMEM sizing: double-buffered x tile + f32 accumulator + (tiny) params + out.
    need = (2 * C * T * x_flat.dtype.itemsize
            + 4 * C * T
            + 2 * 4 * (C * hidden + hidden * out_planes + out_planes)
            + 2 * 4 * out_planes)
    vmem_limit = int(min(max(need + (4 << 20), 32 << 20), 100 << 20))

    cost = pl.CostEstimate(
        flops=B * C * HW + 2 * B * C * hidden + 2 * B * hidden * out_planes,
        transcendentals=B * out_planes,
        bytes_accessed=(x_flat.size * x_flat.dtype.itemsize
                        + (w1.size + w2.size + b2.size) * 4
                        + B * out_planes * 4),
    )

    out = pl.pallas_call(
        functools.partial(_sigma_branch_kernel, inv_hw=1.0 / HW),
        out_shape=jax.ShapeDtypeStruct((B, 1, out_planes), x.dtype),
        grid_spec=pltpu.PrefetchScalarGridSpec(
            num_scalar_prefetch=0,
            grid=(B, n_k),
            in_specs=[
                pl.BlockSpec((1, C, T), lambda b, k: (b, 0, k)),          # x (streamed)
                pl.BlockSpec((C, hidden), lambda b, k: (0, 0)),            # w1 (DMA once)
                pl.BlockSpec((hidden, out_planes), lambda b, k: (0, 0)),   # w2 (DMA once)
                pl.BlockSpec((1, out_planes), lambda b, k: (0, 0)),        # b2 (DMA once)
            ],
            out_specs=pl.BlockSpec((1, 1, out_planes), lambda b, k: (b, 0, 0)),
            scratch_shapes=[pltpu.VMEM((1, C, T), jnp.float32)],
        ),
        compiler_params=pltpu.CompilerParams(
            dimension_semantics=("parallel", "arbitrary"),
            vmem_limit_bytes=vmem_limit,
        ),
        cost_estimate=cost,
    )(x_flat, w1, w2, b2)

    # .view(ba, ch, 3): channel index 3*c + k maps to (c, k) — row-major reshape matches.
    return out.reshape(B, C, 3)


def _reference(x, w1, w2, b2):
    """Pure-JAX reference mirroring the PyTorch forward."""
    pooled = jnp.mean(x.astype(jnp.float32), axis=(2, 3))   # (B, C)
    h = jnp.maximum(pooled @ w1, 0.0)                       # (B, hidden)
    y = h @ w2 + b2                                         # (B, 3C)
    return jax.nn.sigmoid(y).reshape(x.shape[0], x.shape[1], 3)


if __name__ == "__main__":
    B, C, H, W = 2, 8, 32, 32
    ratios = 1.0 / 8
    hidden = int(C * ratios) + 1     # = 2
    out_planes = 3 * C               # = 24

    key = jax.random.PRNGKey(0)
    kx, k1, k2, kb = jax.random.split(key, 4)

    x = jax.random.normal(kx, (B, C, H, W), dtype=jnp.float32)
    # PyTorch shapes: fc1.weight (hidden,C,1,1), fc2.weight (3C,hidden,1,1), fc2.bias (3C,).
    # Stored pre-transposed for the kernel's matmul form.
    w1 = jax.random.normal(k1, (C, hidden), dtype=jnp.float32) * 0.5           # fc1.weight^T
    w2 = jax.random.normal(k2, (hidden, out_planes), dtype=jnp.float32) * 0.5  # fc2.weight^T
    b2 = jax.random.normal(kb, (1, out_planes), dtype=jnp.float32) * 0.1       # fc2.bias

    # Small spatial-tile cap so the toy shape exercises the multi-step
    # accumulation path (HW=1024 -> two 512-wide tiles per batch row).
    out = sigma_branch(x, w1, w2, b2, hw_tile_cap=512)
    out = jax.block_until_ready(out)

    ref = _reference(x, w1, w2, b2)
    assert out.shape == (B, C, 3)
    assert jnp.allclose(out, ref, atol=1e-5, rtol=1e-5)

    print("KERNEL_OK")
</pallas_src>

<mosaic_0001>
module attributes {stable_mosaic.version = 11 : i64} {
  func.func @_sigma_branch_kernel(%arg0: i32, %arg1: i32, %arg2: memref<1x8x512xf32, #tpu.memory_space<vmem>>, %arg3: memref<8x2xf32, #tpu.memory_space<vmem>>, %arg4: memref<2x24xf32, #tpu.memory_space<vmem>>, %arg5: memref<1x24xf32, #tpu.memory_space<vmem>>, %arg6: memref<1x1x24xf32, #tpu.memory_space<vmem>>, %arg7: memref<1x8x512xf32, #tpu.memory_space<vmem>>) attributes {dimension_semantics = [#tpu.dimension_semantics<parallel>, #tpu.dimension_semantics<arbitrary>], iteration_bounds = array<i64: 2, 2>, scalar_prefetch = 0 : i64, scratch_operands = 1 : i64, tpu.core_type = #tpu.core_type<tc>, window_params = [{transform_indices = @transform_0, window_bounds = array<i64: 1, 8, 512>}, {pipeline_mode = #tpu.pipeline_mode<synchronous>, transform_indices = @transform_1, window_bounds = array<i64: 8, 2>}, {pipeline_mode = #tpu.pipeline_mode<synchronous>, transform_indices = @transform_2, window_bounds = array<i64: 2, 24>}, {pipeline_mode = #tpu.pipeline_mode<synchronous>, transform_indices = @transform_3, window_bounds = array<i64: 1, 24>}, {transform_indices = @transform_4, window_bounds = array<i64: 1, 1, 24>}]} {
    %c0_i32 = arith.constant 0 : i32
    %0 = arith.cmpi eq, %arg1, %c0_i32 : i32
    %1 = arith.extui %0 : i1 to i32
    %c0_i32_0 = arith.constant 0 : i32
    %2 = arith.cmpi ne, %1, %c0_i32_0 : i32
    scf.if %2 {
      %cst = arith.constant 0.000000e+00 : f32
      %10 = vector.broadcast %cst : f32 to vector<1x8x512xf32>
      %c0_10 = arith.constant 0 : index
      %c0_11 = arith.constant 0 : index
      %c0_12 = arith.constant 0 : index
      %11 = vector.load %arg7[%c0_10, %c0_11, %c0_12] : memref<1x8x512xf32, #tpu.memory_space<vmem>>, vector<1x8x512xf32>
      tpu.vector_store %arg7[%c0_10, %c0_11, %c0_12], %10 {strides = array<i32>} : memref<1x8x512xf32, #tpu.memory_space<vmem>>, vector<1x8x512xf32>,
    } else {
    }
    %c0 = arith.constant 0 : index
    %c0_1 = arith.constant 0 : index
    %c0_2 = arith.constant 0 : index
    %3 = vector.load %arg7[%c0, %c0_1, %c0_2] : memref<1x8x512xf32, #tpu.memory_space<vmem>>, vector<1x8x512xf32>
    %c0_3 = arith.constant 0 : index
    %c0_4 = arith.constant 0 : index
    %c0_5 = arith.constant 0 : index
    %4 = vector.load %arg2[%c0_3, %c0_4, %c0_5] : memref<1x8x512xf32, #tpu.memory_space<vmem>>, vector<1x8x512xf32>
    %5 = arith.addf %3, %4 : vector<1x8x512xf32>
    %c0_6 = arith.constant 0 : index
    %c0_7 = arith.constant 0 : index
    %c0_8 = arith.constant 0 : index
    %6 = vector.load %arg7[%c0_6, %c0_7, %c0_8] : memref<1x8x512xf32, #tpu.memory_space<vmem>>, vector<1x8x512xf32>
    tpu.vector_store %arg7[%c0_6, %c0_7, %c0_8], %5 {strides = array<i32>} : memref<1x8x512xf32, #tpu.memory_space<vmem>>, vector<1x8x512xf32>,
    %c1_i32 = arith.constant 1 : i32
    %7 = arith.cmpi eq, %arg1, %c1_i32 : i32
    %8 = arith.extui %7 : i1 to i32
    %c0_i32_9 = arith.constant 0 : i32
    %9 = arith.cmpi ne, %8, %c0_i32_9 : i32
    scf.if %9 {
      %c0_10 = arith.constant 0 : index
      %c0_11 = arith.constant 0 : index
      %c0_12 = arith.constant 0 : index
      %10 = vector.load %arg7[%c0_10, %c0_11, %c0_12] : memref<1x8x512xf32, #tpu.memory_space<vmem>>, vector<1x8x512xf32>
      %cst = arith.constant dense<0.000000e+00> : vector<1x8xf32>
      %11 = vector.multi_reduction <add>, %10, %cst [2] : vector<1x8x512xf32> to vector<1x8xf32>
      %cst_13 = arith.constant 9.765625E-4 : f32
      %12 = vector.broadcast %cst_13 : f32 to vector<1x8xf32>
      %13 = arith.mulf %11, %12 : vector<1x8xf32>
      %c0_14 = arith.constant 0 : index
      %c0_15 = arith.constant 0 : index
      %14 = vector.load %arg3[%c0_14, %c0_15] : memref<8x2xf32, #tpu.memory_space<vmem>>, vector<8x2xf32>
      %cst_16 = arith.constant dense<0.000000e+00> : vector<1x2xf32>
      %15 = tpu.matmul %13, %14, %cst_16 {dimension_numbers = #tpu.dot_dimension_numbers<[1], [0], [0], [1], [0, 0, 1, 1], [], []>} : vector<1x8xf32>, vector<8x2xf32>, vector<1x2xf32> -> vector<1x2xf32>
      %cst_17 = arith.constant 0.000000e+00 : f32
      %16 = vector.broadcast %cst_17 : f32 to vector<1x2xf32>
      %17 = arith.maximumf %15, %16 : vector<1x2xf32>
      %c0_18 = arith.constant 0 : index
      %c0_19 = arith.constant 0 : index
      %18 = vector.load %arg4[%c0_18, %c0_19] : memref<2x24xf32, #tpu.memory_space<vmem>>, vector<2x24xf32>
      %cst_20 = arith.constant dense<0.000000e+00> : vector<1x24xf32>
      %19 = tpu.matmul %17, %18, %cst_20 {dimension_numbers = #tpu.dot_dimension_numbers<[1], [0], [0], [1], [0, 0, 1, 1], [], []>} : vector<1x2xf32>, vector<2x24xf32>, vector<1x24xf32> -> vector<1x24xf32>
      %c0_21 = arith.constant 0 : index
      %c0_22 = arith.constant 0 : index
      %20 = vector.load %arg5[%c0_21, %c0_22] : memref<1x24xf32, #tpu.memory_space<vmem>>, vector<1x24xf32>
      %21 = arith.addf %19, %20 : vector<1x24xf32>
      %22 = arith.negf %21 : vector<1x24xf32>
      %23 = math.exp %22 : vector<1x24xf32>
      %cst_23 = arith.constant 1.000000e+00 : f32
      %24 = vector.broadcast %cst_23 : f32 to vector<1x24xf32>
      %25 = arith.addf %24, %23 : vector<1x24xf32>
      %26 = arith.divf %24, %25 : vector<1x24xf32>
      %27 = vector.shape_cast %26 : vector<1x24xf32> to vector<1x1x24xf32>
      %c0_24 = arith.constant 0 : index
      %c0_25 = arith.constant 0 : index
      %c0_26 = arith.constant 0 : index
      %28 = vector.load %arg6[%c0_24, %c0_25, %c0_26] : memref<1x1x24xf32, #tpu.memory_space<vmem>>, vector<1x1x24xf32>
      tpu.vector_store %arg6[%c0_24, %c0_25, %c0_26], %27 {strides = array<i32>} : memref<1x1x24xf32, #tpu.memory_space<vmem>>, vector<1x1x24xf32>,
    } else {
    }
    return
  }
  func.func @transform_0(%arg0: i32, %arg1: i32) -> (i32, i32, i32) {
    %c0_i32 = arith.constant 0 : i32
    %c0_i32_0 = arith.constant 0 : i32
    return %arg0, %c0_i32, %arg1 : i32, i32, i32
  }
  func.func @transform_1(%arg0: i32, %arg1: i32) -> (i32, i32) {
    %c0_i32 = arith.constant 0 : i32
    %c0_i32_0 = arith.constant 0 : i32
    %c0_i32_1 = arith.constant 0 : i32
    return %c0_i32, %c0_i32_0 : i32, i32
  }
  func.func @transform_2(%arg0: i32, %arg1: i32) -> (i32, i32) {
    %c0_i32 = arith.constant 0 : i32
    %c0_i32_0 = arith.constant 0 : i32
    %c0_i32_1 = arith.constant 0 : i32
    return %c0_i32, %c0_i32_0 : i32, i32
  }
  func.func @transform_3(%arg0: i32, %arg1: i32) -> (i32, i32) {
    %c0_i32 = arith.constant 0 : i32
    %c0_i32_0 = arith.constant 0 : i32
    %c0_i32_1 = arith.constant 0 : i32
    return %c0_i32, %c0_i32_0 : i32, i32
  }
  func.func @transform_4(%arg0: i32, %arg1: i32) -> (i32, i32, i32) {
    %c0_i32 = arith.constant 0 : i32
    %c0_i32_0 = arith.constant 0 : i32
    %c0_i32_1 = arith.constant 0 : i32
    return %arg0, %c0_i32, %c0_i32_0 : i32, i32, i32
  }
}

</mosaic_0001>

<llo_original>
// kernel: tpu_custom_call.1
$region0: #{tpu_custom_call.1}
  #allocation0 [shape = 'u32[]', space=smem, size = 0x4, offset = 0x4, fixed_abs, tag = 'smem constant byte address 0x4 - core index']
  #allocation1 [shape = 'u32[72,128]{1,0:T(1,128)}', space=vmem, size = 0x9000, scoped, tag = 'internal scratch']
  #allocation2 [shape = 'f32[1,8,512]{2,1,0:T(8,128)}', space=vmem, size = 0x4000, scoped, tag = 'scratch operand']
  %s0 = inlined_call_operand.hbm [shape: f32[2,8,1024], index: 0, kind: input, shape index: {}]
  %s1 = inlined_call_operand.vmem [shape: f32[8,2], index: 1, kind: input, shape index: {}]
  %s2 = inlined_call_operand.vmem [shape: f32[2,24], index: 2, kind: input, shape index: {}]
  %s3 = inlined_call_operand.vmem [shape: f32[1,24], index: 3, kind: input, shape index: {}]
  %s4 = inlined_call_operand.hbm [shape: f32[2,1,24], index: 4, kind: output, shape index: {}]
  %s5 = sld [smem:[#allocation0]]
  $region61: #{tpu_custom_call.1} parent=0
    _
  %s7 = ssub.s32 1, %s5
  %s8 = scalar_select 0, %s7, %s5
  $region1: #{tpu_custom_call.1} parent=0
    #allocation3 [shape = 'u8[32768]{0}', space=vmem, size = 0x8000, scoped, tag = 'input window, operand 0']
    #allocation4 [shape = 's32[2]{0}', space=sflag, size = 0x8, scoped, tag = 'scoped memory for tpu_custom_call.1']
    #allocation5 [shape = 's32[2]{0}', space=sflag, size = 0x8, scoped, tag = 'scoped memory for tpu_custom_call.1']
    #allocation6 [shape = 'u8[1024]{0}', space=vmem, size = 0x400, scoped, tag = 'output window, operand 0']
    %9 = vsyncpa [#allocation4], 0
    %s10 = scalar_lea.sflag [#allocation4], 1
    %11 = vsyncpa %s10, 0
    %12 = vsyncpa [#allocation5], 0
    %s13 = scalar_lea.sflag [#allocation5], 1
    %14 = vsyncpa %s13, 0
    loop: start=0, step=1, limit=6
    $region2: #{tpu_custom_call.1} parent=1 // loop_pre_header
      _
    $region3: #{tpu_custom_call.1} parent=1 // loop_header
      %s16 = sphi 0, %s20
      %p17 = scmp.ge.s32.totalorder %s16, 6
      %s23 = sphi 0, %s35
      %s24 = sphi 0, %s31
      %s25 = sphi 0, %s23
      %s26 = sphi 0, %s24
      %s27 = sphi 0, %s25
      %s28 = sphi 0, %s26
      %s40 = sphi 0, %s42
      %s43 = sphi 0, %s40
      %s44 = sphi 0, %s43
      %s60 = sphi 0, %s44
      %s64 = sphi 0, %s64
      %s66 = sphi 0, %s64
      %s67 = sphi 0, %s66
      %s81 = sphi 0, %s67
      %s85 = sphi 0, %s85
      %s87 = sphi 0, %s85
      %s88 = sphi 0, %s87
      %s102 = sphi 0, %s88
      %s106 = sphi 0, %s106
      %s108 = sphi 0, %s106
      %s109 = sphi 0, %s108
      %s123 = sphi 0, %s109
      %s129 = sphi 0, %s131
      %s132 = sphi 0, %s129
      %s133 = sphi 0, %s132
      %s149 = sphi 0, %s133
    $region4: #{tpu_custom_call.1} parent=1 // loop_header_branch
      %19 = sbr.rel (%p17) target = $region8
    $region5: #{tpu_custom_call.1} parent=1 // loop_body
      %s21 = ssub.s32 %s16, 1
      %s22 = ssub.s32 %s16, 2
      %s29 = sadd.s32 1, %s24
      %p30 = scmp.ge.s32.totalorder %s29, 2
      %s31 = scalar_select %p30, 0, %s29
      %s32 = sadd.s32 1, %s23
      %s33 = scalar_select %p30, %s32, %s23
      %p34 = scmp.ge.s32.totalorder %s33, 2
      %s35 = scalar_select %p34, 0, %s33
      %s36 = ssub.s32 %s23, %s35
      %s37 = ssub.s32 %s24, %s31
      %s38 = sor.u32 %s36, %s37
      %p39 = scmp.eq.s32.totalorder %s38, 0
      %s41 = sadd.s32 %s40, 1
      %s42 = scalar_select %p39, %s40, %s41
      %p45 = pneg %p39
      %p46 = scmp.eq.s32.totalorder %s16, 3
      %p47 = por %p45, %p46
      %p48 = scmp.ne.s32.totalorder %s40, %s43
      %p49 = scmp.eq.s32.totalorder %s16, 0
      %p50 = por %p48, %p49
      %p51 = scmp.ne.s32.totalorder %s40, %s43
      %p52 = scmp.eq.s32.totalorder %s21, 3
      %p53 = por %p51, %p52
      %p54 = scmp.ne.s32.totalorder %s43, %s44
      %p55 = scmp.eq.s32.totalorder %s21, 0
      %p56 = por %p54, %p55
      %p57 = scmp.ne.s32.totalorder %s43, %s44
      %p58 = scmp.eq.s32.totalorder %s22, 3
      %p59 = por %p57, %p58
      %p61 = scmp.ne.s32.totalorder %s44, %s60
      %p62 = scmp.eq.s32.totalorder %s22, 0
      %p63 = por %p61, %p62
      %s65 = sadd.s32 %s64, 1
      %p68 = scmp.eq.s32.totalorder %s16, 3
      %p69 = scmp.ne.s32.totalorder %s64, %s66
      %p70 = scmp.eq.s32.totalorder %s16, 0
      %p71 = por %p69, %p70
      %p72 = scmp.ne.s32.totalorder %s64, %s66
      %p73 = scmp.eq.s32.totalorder %s21, 3
      %p74 = por %p72, %p73
      %p75 = scmp.ne.s32.totalorder %s66, %s67
      %p76 = scmp.eq.s32.totalorder %s21, 0
      %p77 = por %p75, %p76
      %p78 = scmp.ne.s32.totalorder %s66, %s67
      %p79 = scmp.eq.s32.totalorder %s22, 3
      %p80 = por %p78, %p79
      %p82 = scmp.ne.s32.totalorder %s67, %s81
      %p83 = scmp.eq.s32.totalorder %s22, 0
      %p84 = por %p82, %p83
      %s86 = sadd.s32 %s85, 1
      %p89 = scmp.eq.s32.totalorder %s16, 3
      %p90 = scmp.ne.s32.totalorder %s85, %s87
      %p91 = scmp.eq.s32.totalorder %s16, 0
      %p92 = por %p90, %p91
      %p93 = scmp.ne.s32.totalorder %s85, %s87
      %p94 = scmp.eq.s32.totalorder %s21, 3
      %p95 = por %p93, %p94
      %p96 = scmp.ne.s32.totalorder %s87, %s88
      %p97 = scmp.eq.s32.totalorder %s21, 0
      %p98 = por %p96, %p97
      %p99 = scmp.ne.s32.totalorder %s87, %s88
      %p100 = scmp.eq.s32.totalorder %s22, 3
      %p101 = por %p99, %p100
      %p103 = scmp.ne.s32.totalorder %s88, %s102
      %p104 = scmp.eq.s32.totalorder %s22, 0
      %p105 = por %p103, %p104
      %s107 = sadd.s32 %s106, 1
      %p110 = scmp.eq.s32.totalorder %s16, 3
      %p111 = scmp.ne.s32.totalorder %s106, %s108
      %p112 = scmp.eq.s32.totalorder %s16, 0
      %p113 = por %p111, %p112
      %p114 = scmp.ne.s32.totalorder %s106, %s108
      %p115 = scmp.eq.s32.totalorder %s21, 3
      %p116 = por %p114, %p115
      %p117 = scmp.ne.s32.totalorder %s108, %s109
      %p118 = scmp.eq.s32.totalorder %s21, 0
      %p119 = por %p117, %p118
      %p120 = scmp.ne.s32.totalorder %s108, %s109
      %p121 = scmp.eq.s32.totalorder %s22, 3
      %p122 = por %p120, %p121
      %p124 = scmp.ne.s32.totalorder %s109, %s123
      %p125 = scmp.eq.s32.totalorder %s22, 0
      %p126 = por %p124, %p125
      %s127 = ssub.s32 %s23, %s35
      %p128 = scmp.eq.s32.totalorder %s127, 0
      %s130 = sadd.s32 %s129, 1
      %s131 = scalar_select %p128, %s129, %s130
      %p134 = pneg %p128
      %p135 = scmp.eq.s32.totalorder %s16, 3
      %p136 = por %p134, %p135
      %p137 = scmp.ne.s32.totalorder %s129, %s132
      %p138 = scmp.eq.s32.totalorder %s16, 0
      %p139 = por %p137, %p138
      %p140 = scmp.ne.s32.totalorder %s129, %s132
      %p141 = scmp.eq.s32.totalorder %s21, 3
      %p142 = por %p140, %p141
      %p143 = scmp.ne.s32.totalorder %s132, %s133
      %p144 = scmp.eq.s32.totalorder %s21, 0
      %p145 = por %p143, %p144
      %p146 = scmp.ne.s32.totalorder %s132, %s133
      %p147 = scmp.eq.s32.totalorder %s22, 3
      %p148 = por %p146, %p147
      %p150 = scmp.ne.s32.totalorder %s133, %s149
      %p151 = scmp.eq.s32.totalorder %s22, 0
      %p152 = por %p150, %p151
      %p153 = scmp.le.s32.totalorder 1, %s16
      %p154 = scmp.lt.s32.totalorder %s16, 5
      %p155 = pnand %p153, %p154
      %p156 = pneg %p155
      // Predicated region
      $region9: #{tpu_custom_call.1} parent=5 // pred_check
        _
      $region10: #{tpu_custom_call.1} parent=5 // pred_check_branch
        %158 = sbr.rel (%p155) target = $region12
      $region11: #{tpu_custom_call.1} parent=5 // pred_region
        %s159 = ssub.s32 %s16, 1
        // Predicated region
        $region13: #{tpu_custom_call.1} parent=11 // pred_check
          %p160 = pneg %p77
        $region14: #{tpu_custom_call.1} parent=11 // pred_check_branch
          %162 = sbr.rel (%p160) target = $region16
        $region15: #{tpu_custom_call.1} parent=11 // pred_region
          _
        $region16: #{tpu_custom_call.1} parent=11 // pred_fallthru
          _
        // Predicated region
        $region17: #{tpu_custom_call.1} parent=11 // pred_check
          %p163 = pneg %p98
        $region18: #{tpu_custom_call.1} parent=11 // pred_check_branch
          %165 = sbr.rel (%p163) target = $region20
        $region19: #{tpu_custom_call.1} parent=11 // pred_region
          _
        $region20: #{tpu_custom_call.1} parent=11 // pred_fallthru
          _
        // Predicated region
        $region21: #{tpu_custom_call.1} parent=11 // pred_check
          %p166 = pneg %p119
        $region22: #{tpu_custom_call.1} parent=11 // pred_check_branch
          %168 = sbr.rel (%p166) target = $region24
        $region23: #{tpu_custom_call.1} parent=11 // pred_region
          _
        $region24: #{tpu_custom_call.1} parent=11 // pred_fallthru
          _
      $region12: #{tpu_custom_call.1} parent=5 // pred_fallthru
        _
      %p169 = scmp.lt.s32.totalorder %s16, 4
      // Predicated region
      $region25: #{tpu_custom_call.1} parent=5 // pred_check
        %p170 = pneg %p169
      $region26: #{tpu_custom_call.1} parent=5 // pred_check_branch
        %172 = sbr.rel (%p170) target = $region28
      $region27: #{tpu_custom_call.1} parent=5 // pred_region
        // Predicated region
        $region29: #{tpu_custom_call.1} parent=27 // pred_check
          %p173 = pneg %p50
        $region30: #{tpu_custom_call.1} parent=27 // pred_check_branch
          %175 = sbr.rel (%p173) target = $region32
        $region31: #{tpu_custom_call.1} parent=27 // pred_region
          %s176 = sand.u32 %s40, 1
          %s177 = scalar_lea.sflag [#allocation4], %s176
          %s178 = sand.u32 %s40, 1
          %s179 = smul.addr %s178, 32
          %s180 = scalar_lea.vmem [#allocation3], %s179
          %s181 = smul.u32 4, %s24
          %183 = vsyncadd %s177, 0
          %s184 = smul.addr %s23, 8
          %s185 = sadd.s32 %s181, %s184
          %s186 = smul.addr %s185, 8
          %s187 = scalar_lea.hbm %s0, %s186
          %s189 = sshll.u32 %s187, 4
          %s190 = int_to_ptr.hbm [resolvable:$true] %s189
          %s191 = sshll.u32 %s180, 4
          %s192 = int_to_ptr.vmem [resolvable:$true] %s191
          %194 = dma.hbm_to_vmem [thread:$0]  %s190, 512, %s192, %s177
        $region32: #{tpu_custom_call.1} parent=27 // pred_fallthru
          _
      $region28: #{tpu_custom_call.1} parent=5 // pred_fallthru
        _
      %p195 = scmp.le.s32.totalorder 1, %s16
      %p196 = scmp.lt.s32.totalorder %s16, 5
      %p197 = pnand %p195, %p196
      %p198 = pneg %p197
      // Predicated region
      $region33: #{tpu_custom_call.1} parent=5 // pred_check
        _
      $region34: #{tpu_custom_call.1} parent=5 // pred_check_branch
        %200 = sbr.rel (%p197) target = $region36
      $region35: #{tpu_custom_call.1} parent=5 // pred_region
        %s201 = ssub.s32 %s16, 1
        %s202 = sand.u32 %s43, 1
        %s203 = scalar_lea.sflag [#allocation4], %s202
        %s204 = sand.u32 %s43, 1
        %s205 = smul.addr %s204, 32
        %s206 = scalar_lea.vmem [#allocation3], %s205
        // Predicated region
        $region37: #{tpu_custom_call.1} parent=35 // pred_check
          %p207 = pneg %p56
        $region38: #{tpu_custom_call.1} parent=35 // pred_check_branch
          %209 = sbr.rel (%p207) target = $region40
        $region39: #{tpu_custom_call.1} parent=35 // pred_region
          %211 = dma.done %s203, 512
        $region40: #{tpu_custom_call.1} parent=35 // pred_fallthru
          _
        %s212 = sand.u32 %s43, 1
        %s213 = scalar_lea.sflag [#allocation4], %s212
        %s214 = sand.u32 %s43, 1
        %s215 = smul.addr %s214, 32
        %s216 = scalar_lea.vmem [#allocation3], %s215
        %p217 = pneg %p56
        %p218 = pneg %p53
        %p219 = pneg %p77
        %p220 = pneg %p74
        %p221 = pneg %p98
        %p222 = pneg %p95
        %p223 = pneg %p119
        %p224 = pneg %p116
        %p225 = pneg %p145
        %p226 = pneg %p142
        %s227 = sand.u32 %s132, 1
        %s228 = scalar_lea.sflag [#allocation5], %s227
        %s229 = sand.u32 %s132, 1
        %s230 = scalar_lea.vmem [#allocation6], %s229
        %s231 = smul.u32 4, %s26
        %p232 = scmp.eq.s32.totalorder %s26, 0
        // Predicated region
        $region41: #{tpu_custom_call.1} parent=35 // pred_check
          %p233 = pneg %p232
        $region42: #{tpu_custom_call.1} parent=35 // pred_check_branch
          %235 = sbr.rel (%p233) target = $region44
        $region43: #{tpu_custom_call.1} parent=35 // pred_region
          %236 = vst [vmem:[#allocation2] sm:$0xff] 0.0
          %237 = vst [vmem:[#allocation2 + $0x8] sm:$0xff] 0.0
          %238 = vst [vmem:[#allocation2 + $0x10] sm:$0xff] 0.0
          %239 = vst [vmem:[#allocation2 + $0x18] sm:$0xff] 0.0
        $region44: #{tpu_custom_call.1} parent=35 // pred_fallthru
          _
        %v240 = vld [vmem:[#allocation2] sm:$0xff]
        %v241 = vld [vmem:[#allocation2 + $0x8] sm:$0xff]
        %v242 = vld [vmem:[#allocation2 + $0x10] sm:$0xff]
        %v243 = vld [vmem:[#allocation2 + $0x18] sm:$0xff]
        %v244 = vld [vmem:[%s206] sm:$0xff]
        %v245 = vld [vmem:[%s206 + $0x8] sm:$0xff]
        %v246 = vld [vmem:[%s206 + $0x10] sm:$0xff]
        %v247 = vld [vmem:[%s206 + $0x18] sm:$0xff]
        %v248 = vadd.f32 %v240, %v244
        %v249 = vadd.f32 %v241, %v245
        %v250 = vadd.f32 %v242, %v246
        %v251 = vadd.f32 %v243, %v247
        %252 = vst [vmem:[#allocation2] sm:$0xff] %v248
        %253 = vst [vmem:[#allocation2 + $0x8] sm:$0xff] %v249
        %254 = vst [vmem:[#allocation2 + $0x10] sm:$0xff] %v250
        %255 = vst [vmem:[#allocation2 + $0x18] sm:$0xff] %v251
        %p256 = scmp.eq.s32.totalorder %s26, 1
        // Predicated region
        $region45: #{tpu_custom_call.1} parent=35 // pred_check
          %p257 = pneg %p256
        $region46: #{tpu_custom_call.1} parent=35 // pred_check_branch
          %259 = sbr.rel (%p257) target = $region48
        $region47: #{tpu_custom_call.1} parent=35 // pred_region
          %v260 = vld [vmem:[#allocation2] sm:$0xff]
          %v261 = vld [vmem:[#allocation2 + $0x8] sm:$0xff]
          %v262 = vld [vmem:[#allocation2 + $0x10] sm:$0xff]
          %v263 = vld [vmem:[#allocation2 + $0x18] sm:$0xff]
          %v264 = vadd.f32 %v260, %v261
          %v265 = vadd.f32 %v264, %v262
          %v266 = vadd.f32 %v265, %v263
          %267 = vadd.xlane.f32.xlu0 %v266
          %v268 = vpop.xlane.xlu0 %267
          %v269 = vmul.f32 %v268, 0.0009765625
          %v270 = vld [vmem:[%s1] sm:$0xff]
          %v272 = vlaneseq
          %v273 = vand.u32 %v272, 127
          %v274 = vperm.slane %v269, %v273
          %vm275 = vcmask 64512
          %v276 = vsel %vm275, %v274, 0
          %278 = vmatpush.msra.mxu0 0.0
          %279 = vmatpush.msra.mxu0 0.0
          %280 = vmatpush.msra.mxu0 0.0
          %281 = vmatpush.msra.mxu0 0.0
          %282 = vmatpush.msra.mxu0 0.0
          %283 = vmatpush.msra.mxu0 0.0
          %284 = vmatpush.msra.mxu0 0.0
          %285 = vmatpush.msra.mxu0 0.0
          %286 = vmatpush.msra.mxu0 0.0
          %287 = vmatpush.msra.mxu0 0.0
          %288 = vmatpush.msra.mxu0 0.0
          %289 = vmatpush.msra.mxu0 0.0
          %290 = vmatpush.msra.mxu0 0.0
          %291 = vmatpush.msra.mxu0 0.0
          %292 = vmatpush.msra.mxu0 0.0
          %293 = vmatpush.msra.mxu0 %v270
          %294 = vmatmul.f32.gmra.mxu0 %v276
          %v295 = vpop.f32.mrf.mxu0
          %v296 = vadd.f32 0.0, %v295
          %297 = vdwg.mxu0
          %v298 = vmax.f32 %v296, 0.0
          %v299 = vld [vmem:[%s2] sm:$0x3]
          %v300 = vld [vmem:[%s3] sm:$0x1]
          %vm301 = vcmask 15360
          %v303 = vsel %vm301, %v298, 0
          %vm305 = vcmask 1041408
          %v307 = vsel %vm305, %v299, 0
          %309 = vmatpush.msra.mxu0 0.0
          %310 = vmatpush.msra.mxu0 0.0
          %311 = vmatpush.msra.mxu0 0.0
          %312 = vmatpush.msra.mxu0 0.0
          %313 = vmatpush.msra.mxu0 0.0
          %314 = vmatpush.msra.mxu0 0.0
          %315 = vmatpush.msra.mxu0 0.0
          %316 = vmatpush.msra.mxu0 0.0
          %317 = vmatpush.msra.mxu0 0.0
          %318 = vmatpush.msra.mxu0 0.0
          %319 = vmatpush.msra.mxu0 0.0
          %320 = vmatpush.msra.mxu0 0.0
          %321 = vmatpush.msra.mxu0 0.0
          %322 = vmatpush.msra.mxu0 0.0
          %323 = vmatpush.msra.mxu0 0.0
          %324 = vmatpush.msra.mxu0 %v307
          %325 = vmatmul.f32.gmra.mxu0 %v303
          %v326 = vpop.f32.mrf.mxu0
          %v327 = vadd.f32 %v300, %v326
          %328 = vdwg.mxu0
          %v329 = vxor.u32 %v327, 2147483648
          %v330 = vmul.f32 %v329, 1.442695
          %v331 = vpow.pop %v330
          %v332 = vadd.f32 %v331, 1.0
          %v333 = vrcp.pop %v332
          %v334 = vmul.f32 %v332, %v333
          %v335 = vsub.f32 1.0, %v334
          %v336 = vmul.f32 %v333, %v335
          %v337 = vadd.f32 %v333, %v336
          %vm338 = vweird.f32 %v332
          %vm339 = vweird.f32 %v333
          %vm340 = vmor %vm338, %vm339
          %v341 = vsel %vm340, %v333, %v337
          %v342 = vand.u32 2147483647, %v332
          %vm343 = vcmp.eq.f32.partialorder %v342, 8.507059e+37
          %v344 = vand.u32 %v332, 2147483648
          %v345 = vor.u32 1.1754944e-38, %v344
          %v346 = vsel %vm343, %v345, %v341
          %v347 = vmul.f32 1.0, %v346
          %vm348 = vcmask 188416
          %349 = vst.msk [vmem:[%s230] sm:$0x1] %vm348, %v347
        $region48: #{tpu_custom_call.1} parent=35 // pred_fallthru
          _
        %s350 = sand.u32 %s132, 1
        %s351 = scalar_lea.sflag [#allocation5], %s350
        %s352 = sand.u32 %s132, 1
        %s353 = scalar_lea.vmem [#allocation6], %s352
        // Predicated region
        $region49: #{tpu_custom_call.1} parent=35 // pred_check
          %p354 = pneg %p142
        $region50: #{tpu_custom_call.1} parent=35 // pred_check_branch
          %356 = sbr.rel (%p354) target = $region52
        $region51: #{tpu_custom_call.1} parent=35 // pred_region
          %358 = vsyncadd %s351, 0
          %s359 = scalar_lea.hbm %s4, %s25
          %s361 = sshll.u32 %s353, 4
          %s362 = int_to_ptr.vmem [resolvable:$true] %s361
          %s363 = sshll.u32 %s359, 4
          %s364 = int_to_ptr.hbm [resolvable:$true] %s363
          %366 = dma.vmem_to_hbm [thread:$0]  %s362, 16, %s364, %s351
        $region52: #{tpu_custom_call.1} parent=35 // pred_fallthru
          _
      $region36: #{tpu_custom_call.1} parent=5 // pred_fallthru
        _
      %p367 = scmp.le.s32.totalorder 2, %s16
      // Predicated region
      $region53: #{tpu_custom_call.1} parent=5 // pred_check
        %p368 = pneg %p367
      $region54: #{tpu_custom_call.1} parent=5 // pred_check_branch
        %370 = sbr.rel (%p368) target = $region56
      $region55: #{tpu_custom_call.1} parent=5 // pred_region
        %s371 = ssub.s32 %s16, 2
        // Predicated region
        $region57: #{tpu_custom_call.1} parent=55 // pred_check
          %p372 = pneg %p148
        $region58: #{tpu_custom_call.1} parent=55 // pred_check_branch
          %374 = sbr.rel (%p372) target = $region60
        $region59: #{tpu_custom_call.1} parent=55 // pred_region
          %s375 = sand.u32 %s133, 1
          %s376 = scalar_lea.sflag [#allocation5], %s375
          %s377 = sand.u32 %s133, 1
          %s378 = scalar_lea.vmem [#allocation6], %s377
          %380 = dma.done %s376, 16
        $region60: #{tpu_custom_call.1} parent=55 // pred_fallthru
          _
      $region56: #{tpu_custom_call.1} parent=5 // pred_fallthru
        _
    $region6: #{tpu_custom_call.1} parent=1 // loop_footer
      %s20 = sadd.s32 1, %s16
    $region7: #{tpu_custom_call.1} parent=1 // loop_footer_branch
      %15 = sbr.rel target = $region3
    $region8: #{tpu_custom_call.1} parent=1 // loop_exit
      _
    %381 = vsyncpa [#allocation4], 1
    %s382 = scalar_lea.sflag [#allocation4], 1
    %383 = vsyncpa %s382, 1
    %384 = vsyncpa [#allocation5], 1
    %s385 = scalar_lea.sflag [#allocation5], 1
    %386 = vsyncpa %s385, 1

</llo_original>
